<compile_context>
chip_gen: v7x
topology: tpu7x:2x2x1
jax: 0.10.0
libtpu: 0.0.40
codegen_flags: <defaults>
</compile_context>

<pallas_src>
import functools

import jax
import jax.numpy as jnp
from jax import lax
from jax.experimental import pallas as pl
from jax.experimental.pallas import tpu as pltpu

TEMPERATURE = 0.1


def _ntxent_tile_kernel(pos_ref, all_ref, part_ref, *, block_rows, inv_temp):
    i = pl.program_id(0)
    start = pl.multiple_of(i * block_rows, block_rows)

    allx = all_ref[...]                                  # (N, D) bf16, VMEM-resident
    rows = all_ref[pl.ds(start, block_rows), :]          # (tm, D) bf16 strip (same operand)

    # (tm, N) strip of the cosine-similarity matrix on the MXU; contract the
    # last axes of both operands (row-major in, no transpose).  Scale by 1/T in
    # f32 after the matmul so the computed matrix is exactly symmetric.
    logits = lax.dot_general(
        rows, allx,
        dimension_numbers=(((1,), (1,)), ((), ())),
        preferred_element_type=jnp.float32) * inv_temp   # (tm, N) f32

    # mat = exp(sim/T); fill_diagonal_(0) via an exact mask on the strip the
    # MXU produced (bit-exact cancellation, no recomputed diagonal).
    # NOTE: exp + mask may materialize one extra (tm, N) f32 slab; it is
    # accounted for in the wrapper's VMEM estimate.
    mat = jnp.exp(logits)
    local_row = lax.broadcasted_iota(jnp.int32, mat.shape, 0)
    col = lax.broadcasted_iota(jnp.int32, mat.shape, 1)
    mat = jnp.where(col == local_row + start, 0.0, mat)

    # Row sums of mat (== PyTorch's column sums: the computed matrix is exactly
    # symmetric because both MXU operands are the same bf16 array).
    denom = jnp.sum(mat, axis=-1, keepdims=True)         # (tm, 1)

    # Positive-pair logit: log(numer[i]) = sim[i, (i+B) mod N] / T  (O(tm*D)).
    pos_logit = inv_temp * jnp.sum(
        rows.astype(jnp.float32) * pos_ref[...].astype(jnp.float32),
        axis=-1, keepdims=True)                          # (tm, 1)

    # Sum of per-row  -log(numer/denom) = log(denom) - pos_logit  for this
    # strip, broadcast into an (8, 128)-aligned partial-loss block.
    partial = jnp.sum(jnp.log(denom) - pos_logit)
    part_ref[...] = jnp.full((1, 8, 128), partial, dtype=jnp.float32)


def ntxent_loss(x, batch_size, *, block_rows=256, matmul_dtype=jnp.bfloat16):
    """x: (2*batch_size, D) float array. Returns scalar loss (float32).

    block_rows guidance: v7x (64 MiB VMEM/TC) keep 256; v6e/v5e (128 MiB)
    sweep 512/1024 at production N=8192 to amortize per-step pipeline overhead.
    """
    n, d = x.shape
    assert n == 2 * batch_size, "NTXentLoss expects 2*batch_size rows"

    tm = min(block_rows, n)
    assert n % tm == 0, f"row tile {tm} must divide N={n}"
    num_tiles = n // tm

    # Hoisted O(N*D) prep: normalize once, build positive-partner rows, cast to
    # bf16 for the MXU.  None of this is repeated inside the N^2 hot path.
    # (torch cosine_similarity clamps the *product* of norms at eps=1e-8; we
    # clamp each row norm -- identical for non-degenerate rows.)
    xf = x.astype(jnp.float32)
    norm = jnp.maximum(jnp.sqrt(jnp.sum(xf * xf, axis=-1, keepdims=True)), 1e-8)
    xn = (xf / norm).astype(matmul_dtype)                 # resident MXU operand
    xn_pos = jnp.roll(xn, shift=-batch_size, axis=0)      # row i's positive partner

    # Real VMEM footprint (resident xn single-buffered, pos strip double-
    # buffered, logits strip + exp/mask temporaries, small f32 row temps,
    # output block) plus headroom for Mosaic internal scratch.  Never the full
    # per-TC capacity.
    strip_bytes = tm * n * 4
    est = (n * d * 2                  # resident xn (bf16, single buffer)
           + 2 * tm * d * 2           # double-buffered positive-pair stream
           + 4 * strip_bytes          # logits + exp/mask temporaries
           + 4 * tm * d               # f32 row-strip temporaries
           + 2 * 8 * 128 * 4)         # partial-loss output blocks
    vmem_limit = int(min(est + (16 << 20), 112 << 20))

    kernel = functools.partial(_ntxent_tile_kernel, block_rows=tm,
                               inv_temp=1.0 / TEMPERATURE)
    partials = pl.pallas_call(
        kernel,
        grid=(num_tiles,),
        in_specs=[
            # Positive-partner rows: streamed per-strip (default double-buffer).
            pl.BlockSpec((tm, d), lambda i: (i, 0)),
            # Full normalized x: VMEM-resident, single-buffered (never changes).
            pl.BlockSpec((n, d), lambda i: (0, 0), pipeline_mode=pl.Buffered(1)),
        ],
        out_specs=pl.BlockSpec((1, 8, 128), lambda i: (i, 0, 0)),
        out_shape=jax.ShapeDtypeStruct((num_tiles, 8, 128), jnp.float32),
        compiler_params=pltpu.CompilerParams(
            dimension_semantics=("parallel",),   # megacore-shardable row strips
            vmem_limit_bytes=vmem_limit,
        ),
        cost_estimate=pl.CostEstimate(
            flops=2 * n * n * d,
            transcendentals=n * n,
            bytes_accessed=2 * n * d * 2 + num_tiles * 8 * 128 * 4),
    )(xn_pos, xn)

    return jnp.sum(partials[:, 0, 0]) / n


def _reference_loss(x, batch_size):
    # Plain-JAX f32 reference mirroring the PyTorch module, for validation only.
    n = x.shape[0]
    xf = x.astype(jnp.float32)
    xn = xf / jnp.maximum(jnp.linalg.norm(xf, axis=-1, keepdims=True), 1e-8)
    sim = xn @ xn.T
    mat = jnp.exp(sim / TEMPERATURE)
    mat = mat * (1.0 - jnp.eye(n, dtype=mat.dtype))
    numer = jnp.concatenate(
        [jnp.diag(mat, -batch_size), jnp.diag(mat, batch_size)], axis=0)
    denom = mat.sum(axis=0)
    return -jnp.sum(jnp.log(numer / denom)) / (2.0 * batch_size)


if __name__ == "__main__":
    # Small shapes consistent with the module (production is batch_size=4096,
    # i.e. x of shape (8192, D)).  Here: batch_size=256 -> x is (512, 128),
    # tiled into 4 row strips of 128 rows so the grid path is exercised.
    batch_size = 256
    n, d = 2 * batch_size, 128

    key = jax.random.PRNGKey(0)
    x = jax.random.normal(key, (n, d), dtype=jnp.float32)

    loss_fn = jax.jit(lambda v: ntxent_loss(v, batch_size, block_rows=128))
    loss = jax.block_until_ready(loss_fn(x))

    ref = _reference_loss(x, batch_size)
    # bf16 MXU operands -> validate against the f32 reference with a looser
    # tolerance (diagonal removal and row/column symmetry are now exact; the
    # remaining error is bf16 rounding of the normalized inputs).
    assert jnp.allclose(loss, ref, rtol=1e-2, atol=1e-2), (loss, ref)

    print("KERNEL_OK")
</pallas_src>

<mosaic_0001>
module attributes {stable_mosaic.version = 11 : i64} {
  func.func @_ntxent_tile_kernel(%arg0: i32, %arg1: memref<128x128xbf16, #tpu.memory_space<vmem>>, %arg2: memref<512x128xbf16, #tpu.memory_space<vmem>>, %arg3: memref<1x8x128xf32, #tpu.memory_space<vmem>>) attributes {dimension_semantics = [#tpu.dimension_semantics<parallel>], iteration_bounds = array<i64: 4>, scalar_prefetch = 0 : i64, scratch_operands = 0 : i64, tpu.core_type = #tpu.core_type<tc>, window_params = [{transform_indices = @transform_0, window_bounds = array<i64: 128, 128>}, {pipeline_mode = #tpu.pipeline_mode<synchronous>, transform_indices = @transform_1, window_bounds = array<i64: 512, 128>}, {transform_indices = @transform_2, window_bounds = array<i64: 1, 8, 128>}]} {
    %c128_i32 = arith.constant 128 : i32
    %0 = arith.muli %arg0, %c128_i32 : i32
    %1 = tpu.assume_multiple %0, 128 : i32
    %c0 = arith.constant 0 : index
    %c0_0 = arith.constant 0 : index
    %2 = vector.load %arg2[%c0, %c0_0] : memref<512x128xbf16, #tpu.memory_space<vmem>>, vector<512x128xbf16>
    %3 = arith.index_cast %1 : i32 to index
    %c0_1 = arith.constant 0 : index
    %4 = vector.load %arg2[%3, %c0_1] : memref<512x128xbf16, #tpu.memory_space<vmem>>, vector<128x128xbf16>
    %cst = arith.constant dense<0.000000e+00> : vector<128x512xf32>
    %5 = tpu.matmul %4, %2, %cst {dimension_numbers = #tpu.dot_dimension_numbers<[1], [1], [0], [0], [0, 0, 1, 0], [], []>} : vector<128x128xbf16>, vector<512x128xbf16>, vector<128x512xf32> -> vector<128x512xf32>
    %cst_2 = arith.constant 1.000000e+01 : f32
    %6 = vector.broadcast %cst_2 : f32 to vector<128x512xf32>
    %7 = arith.mulf %5, %6 : vector<128x512xf32>
    %8 = math.exp %7 : vector<128x512xf32>
    %9 = tpu.iota {dimensions = array<i32: 0>} : vector<128x512xi32>
    %10 = tpu.iota {dimensions = array<i32: 1>} : vector<128x512xi32>
    %11 = vector.broadcast %1 : i32 to vector<128x512xi32>
    %12 = arith.addi %9, %11 : vector<128x512xi32>
    %13 = arith.cmpi eq, %10, %12 : vector<128x512xi32>
    %cst_3 = arith.constant 0.000000e+00 : f32
    %14 = vector.broadcast %cst_3 : f32 to vector<128x512xf32>
    %15 = arith.select %13, %14, %8 : vector<128x512xi1>, vector<128x512xf32>
    %cst_4 = arith.constant dense<0.000000e+00> : vector<128xf32>
    %16 = vector.multi_reduction <add>, %15, %cst_4 [1] : vector<128x512xf32> to vector<128xf32>
    %17 = vector.shape_cast %16 : vector<128xf32> to vector<128x1xf32>
    %18 = arith.extf %4 : vector<128x128xbf16> to vector<128x128xf32>
    %c0_5 = arith.constant 0 : index
    %c0_6 = arith.constant 0 : index
    %19 = vector.load %arg1[%c0_5, %c0_6] : memref<128x128xbf16, #tpu.memory_space<vmem>>, vector<128x128xbf16>
    %20 = arith.extf %19 : vector<128x128xbf16> to vector<128x128xf32>
    %21 = arith.mulf %18, %20 : vector<128x128xf32>
    %cst_7 = arith.constant dense<0.000000e+00> : vector<128xf32>
    %22 = vector.multi_reduction <add>, %21, %cst_7 [1] : vector<128x128xf32> to vector<128xf32>
    %23 = vector.shape_cast %22 : vector<128xf32> to vector<128x1xf32>
    %cst_8 = arith.constant 1.000000e+01 : f32
    %24 = vector.broadcast %cst_8 : f32 to vector<128x1xf32>
    %25 = arith.mulf %24, %23 : vector<128x1xf32>
    %26 = math.log %17 : vector<128x1xf32>
    %27 = arith.subf %26, %25 : vector<128x1xf32>
    %28 = vector.shape_cast %27 : vector<128x1xf32> to vector<1x128x1xf32>
    %cst_9 = arith.constant dense<0.000000e+00> : vector<1xf32>
    %29 = vector.multi_reduction <add>, %28, %cst_9 [1, 2] : vector<1x128x1xf32> to vector<1xf32>
    %30 = vector.shape_cast %29 : vector<1xf32> to vector<1x1x1xf32>
    %31 = vector.extract %30[0, 0, 0] : f32 from vector<1x1x1xf32>
    %32 = vector.broadcast %31 : f32 to vector<1x8x128xf32>
    %c0_10 = arith.constant 0 : index
    %c0_11 = arith.constant 0 : index
    %c0_12 = arith.constant 0 : index
    %33 = vector.load %arg3[%c0_10, %c0_11, %c0_12] : memref<1x8x128xf32, #tpu.memory_space<vmem>>, vector<1x8x128xf32>
    tpu.vector_store %arg3[%c0_10, %c0_11, %c0_12], %32 {strides = array<i32>} : memref<1x8x128xf32, #tpu.memory_space<vmem>>, vector<1x8x128xf32>,
    return
  }
  func.func @transform_0(%arg0: i32) -> (i32, i32) {
    %c0_i32 = arith.constant 0 : i32
    %c0_i32_0 = arith.constant 0 : i32
    return %arg0, %c0_i32 : i32, i32
  }
  func.func @transform_1(%arg0: i32) -> (i32, i32) {
    %c0_i32 = arith.constant 0 : i32
    %c0_i32_0 = arith.constant 0 : i32
    %c0_i32_1 = arith.constant 0 : i32
    return %c0_i32, %c0_i32_0 : i32, i32
  }
  func.func @transform_2(%arg0: i32) -> (i32, i32, i32) {
    %c0_i32 = arith.constant 0 : i32
    %c0_i32_0 = arith.constant 0 : i32
    %c0_i32_1 = arith.constant 0 : i32
    return %arg0, %c0_i32, %c0_i32_0 : i32, i32, i32
  }
}

</mosaic_0001>

<llo_original>
// kernel: _lambda_.1
$region0: #{_lambda_.1}
  #allocation0 [shape = 'u32[]', space=smem, size = 0x4, offset = 0x4, fixed_abs, tag = 'smem constant byte address 0x4 - core index']
  #allocation1 [shape = 'u32[144,128]{1,0:T(1,128)}', space=vmem, size = 0x12000, scoped, tag = 'internal scratch']
  %s0 = inlined_call_operand.vmem [shape: bf16[512,128], index: 0, kind: input, shape index: {}]
  %s1 = inlined_call_operand.vmem [shape: bf16[512,128], index: 1, kind: input, shape index: {}]
  %s2 = inlined_call_operand.vmem [shape: f32[4,8,128], index: 2, kind: output, shape index: {}]
  %s3 = sld [smem:[#allocation0]]
  $region41: #{_lambda_.1} parent=0
    _
  %s5 = ssub.s32 1, %s3
  %s6 = scalar_select 0, %s5, %s3
  loop: start=0, step=1, limit=6
  $region2: #{_lambda_.1} parent=0 // loop_pre_header
    _
  $region3: #{_lambda_.1} parent=0 // loop_header
    %s8 = sphi 0, %s12
    %p9 = scmp.ge.s32.totalorder %s8, 6
    %s18 = sphi 0, %s20
    %s21 = sphi 0, %s18
    %s22 = sphi 0, %s21
    %s38 = sphi 0, %s22
    %s42 = sphi 0, %s42
    %s44 = sphi 0, %s42
    %s45 = sphi 0, %s44
    %s59 = sphi 0, %s45
    %s65 = sphi 0, %s67
    %s68 = sphi 0, %s65
    %s69 = sphi 0, %s68
    %s85 = sphi 0, %s69
  $region4: #{_lambda_.1} parent=0 // loop_header_branch
    %11 = sbr.rel (%p9) target = $region8
  $region5: #{_lambda_.1} parent=0 // loop_body
    %s13 = ssub.s32 %s8, 1
    %s14 = ssub.s32 %s8, 2
    %s15 = sadd.s32 %s8, 1
    %s16 = ssub.s32 %s8, %s15
    %p17 = scmp.eq.s32.totalorder %s16, 0
    %s19 = sadd.s32 %s18, 1
    %s20 = scalar_select %p17, %s18, %s19
    %p23 = pneg %p17
    %p24 = scmp.eq.s32.totalorder %s8, 3
    %p25 = por %p23, %p24
    %p26 = scmp.ne.s32.totalorder %s18, %s21
    %p27 = scmp.eq.s32.totalorder %s8, 0
    %p28 = por %p26, %p27
    %p29 = scmp.ne.s32.totalorder %s18, %s21
    %p30 = scmp.eq.s32.totalorder %s13, 3
    %p31 = por %p29, %p30
    %p32 = scmp.ne.s32.totalorder %s21, %s22
    %p33 = scmp.eq.s32.totalorder %s13, 0
    %p34 = por %p32, %p33
    %p35 = scmp.ne.s32.totalorder %s21, %s22
    %p36 = scmp.eq.s32.totalorder %s14, 3
    %p37 = por %p35, %p36
    %p39 = scmp.ne.s32.totalorder %s22, %s38
    %p40 = scmp.eq.s32.totalorder %s14, 0
    %p41 = por %p39, %p40
    %s43 = sadd.s32 %s42, 1
    %p46 = scmp.eq.s32.totalorder %s8, 3
    %p47 = scmp.ne.s32.totalorder %s42, %s44
    %p48 = scmp.eq.s32.totalorder %s8, 0
    %p49 = por %p47, %p48
    %p50 = scmp.ne.s32.totalorder %s42, %s44
    %p51 = scmp.eq.s32.totalorder %s13, 3
    %p52 = por %p50, %p51
    %p53 = scmp.ne.s32.totalorder %s44, %s45
    %p54 = scmp.eq.s32.totalorder %s13, 0
    %p55 = por %p53, %p54
    %p56 = scmp.ne.s32.totalorder %s44, %s45
    %p57 = scmp.eq.s32.totalorder %s14, 3
    %p58 = por %p56, %p57
    %p60 = scmp.ne.s32.totalorder %s45, %s59
    %p61 = scmp.eq.s32.totalorder %s14, 0
    %p62 = por %p60, %p61
    %s63 = ssub.s32 %s8, %s15
    %p64 = scmp.eq.s32.totalorder %s63, 0
    %s66 = sadd.s32 %s65, 1
    %s67 = scalar_select %p64, %s65, %s66
    %p70 = pneg %p64
    %p71 = scmp.eq.s32.totalorder %s8, 3
    %p72 = por %p70, %p71
    %p73 = scmp.ne.s32.totalorder %s65, %s68
    %p74 = scmp.eq.s32.totalorder %s8, 0
    %p75 = por %p73, %p74
    %p76 = scmp.ne.s32.totalorder %s65, %s68
    %p77 = scmp.eq.s32.totalorder %s13, 3
    %p78 = por %p76, %p77
    %p79 = scmp.ne.s32.totalorder %s68, %s69
    %p80 = scmp.eq.s32.totalorder %s13, 0
    %p81 = por %p79, %p80
    %p82 = scmp.ne.s32.totalorder %s68, %s69
    %p83 = scmp.eq.s32.totalorder %s14, 3
    %p84 = por %p82, %p83
    %p86 = scmp.ne.s32.totalorder %s69, %s85
    %p87 = scmp.eq.s32.totalorder %s14, 0
    %p88 = por %p86, %p87
    %p89 = scmp.le.s32.totalorder 1, %s8
    %p90 = scmp.lt.s32.totalorder %s8, 5
    %p91 = pnand %p89, %p90
    %p92 = pneg %p91
    // Predicated region
    $region9: #{_lambda_.1} parent=5 // pred_check
      _
    $region10: #{_lambda_.1} parent=5 // pred_check_branch
      %94 = sbr.rel (%p91) target = $region12
    $region11: #{_lambda_.1} parent=5 // pred_region
      %s95 = ssub.s32 %s8, 1
      // Predicated region
      $region13: #{_lambda_.1} parent=11 // pred_check
        %p96 = pneg %p55
      $region14: #{_lambda_.1} parent=11 // pred_check_branch
        %98 = sbr.rel (%p96) target = $region16
      $region15: #{_lambda_.1} parent=11 // pred_region
        _
      $region16: #{_lambda_.1} parent=11 // pred_fallthru
        _
    $region12: #{_lambda_.1} parent=5 // pred_fallthru
      _
    %p99 = scmp.lt.s32.totalorder %s8, 4
    // Predicated region
    $region17: #{_lambda_.1} parent=5 // pred_check
      %p100 = pneg %p99
    $region18: #{_lambda_.1} parent=5 // pred_check_branch
      %102 = sbr.rel (%p100) target = $region20
    $region19: #{_lambda_.1} parent=5 // pred_region
      // Predicated region
      $region21: #{_lambda_.1} parent=19 // pred_check
        %p103 = pneg %p28
      $region22: #{_lambda_.1} parent=19 // pred_check_branch
        %105 = sbr.rel (%p103) target = $region24
      $region23: #{_lambda_.1} parent=19 // pred_region
        %s106 = smul.u32 16, %s8
        %p107 = scmp.lt.s32.totalorder %s106, 63
        %s108 = scalar_select %p107, %s106, 63
        %s109 = smul.addr %s108, 4
        %s110 = scalar_lea.vmem %s0, %s109
        %s111 = smul.u32 16, %s8
      $region24: #{_lambda_.1} parent=19 // pred_fallthru
        _
    $region20: #{_lambda_.1} parent=5 // pred_fallthru
      _
    %p112 = scmp.le.s32.totalorder 1, %s8
    %p113 = scmp.lt.s32.totalorder %s8, 5
    %p114 = pnand %p112, %p113
    %p115 = pneg %p114
    // Predicated region
    $region25: #{_lambda_.1} parent=5 // pred_check
      _
    $region26: #{_lambda_.1} parent=5 // pred_check_branch
      %117 = sbr.rel (%p114) target = $region28
    $region27: #{_lambda_.1} parent=5 // pred_region
      %s118 = ssub.s32 %s8, 1
      %s119 = smul.u32 16, %s13
      %p120 = scmp.lt.s32.totalorder %s119, 63
      %s121 = scalar_select %p120, %s119, 63
      %s122 = smul.addr %s121, 4
      %s123 = scalar_lea.vmem %s0, %s122
      %p124 = pneg %p34
      %p125 = pneg %p31
      %p126 = pneg %p55
      %p127 = pneg %p52
      %p128 = pneg %p81
      %p129 = pneg %p78
      %p130 = scmp.lt.s32.totalorder %s13, 3
      %s131 = scalar_select %p130, %s13, 3
      %s132 = smul.addr %s131, 8
      %s133 = scalar_lea.vmem %s2, %s132
      %s134 = smul.u32 16, %s13
      %p135 = scmp.lt.s32.totalorder %s134, 63
      %s136 = scalar_select %p135, %s134, 63
      %s137 = smul.addr %s136, 4
      %s138 = scalar_lea.vmem %s0, %s137
      %s139 = smul.u32 16, %s13
      %p140 = scmp.lt.s32.totalorder %s13, 3
      %s141 = scalar_select %p140, %s13, 3
      %s142 = smul.addr %s141, 8
      %s143 = scalar_lea.vmem %s2, %s142
      %s145 = smul.u32 %s13, 128
      %v146 = vld [vmem:[%s1] sm:$0xf]
      %v147 = vld [vmem:[%s1 + $0x4] sm:$0xf]
      %v148 = vld [vmem:[%s1 + $0x8] sm:$0xf]
      %v149 = vld [vmem:[%s1 + $0xc] sm:$0xf]
      %v150 = vld [vmem:[%s1 + $0x10] sm:$0xf]
      %v151 = vld [vmem:[%s1 + $0x14] sm:$0xf]
      %v152 = vld [vmem:[%s1 + $0x18] sm:$0xf]
      %v153 = vld [vmem:[%s1 + $0x1c] sm:$0xf]
      %v154 = vld [vmem:[%s1 + $0x20] sm:$0xf]
      %v155 = vld [vmem:[%s1 + $0x24] sm:$0xf]
      %v156 = vld [vmem:[%s1 + $0x28] sm:$0xf]
      %v157 = vld [vmem:[%s1 + $0x2c] sm:$0xf]
      %v158 = vld [vmem:[%s1 + $0x30] sm:$0xf]
      %v159 = vld [vmem:[%s1 + $0x34] sm:$0xf]
      %v160 = vld [vmem:[%s1 + $0x38] sm:$0xf]
      %v161 = vld [vmem:[%s1 + $0x3c] sm:$0xf]
      %v162 = vld [vmem:[%s1 + $0x40] sm:$0xf]
      %v163 = vld [vmem:[%s1 + $0x44] sm:$0xf]
      %v164 = vld [vmem:[%s1 + $0x48] sm:$0xf]
      %v165 = vld [vmem:[%s1 + $0x4c] sm:$0xf]
      %v166 = vld [vmem:[%s1 + $0x50] sm:$0xf]
      %v167 = vld [vmem:[%s1 + $0x54] sm:$0xf]
      %v168 = vld [vmem:[%s1 + $0x58] sm:$0xf]
      %v169 = vld [vmem:[%s1 + $0x5c] sm:$0xf]
      %v170 = vld [vmem:[%s1 + $0x60] sm:$0xf]
      %v171 = vld [vmem:[%s1 + $0x64] sm:$0xf]
      %v172 = vld [vmem:[%s1 + $0x68] sm:$0xf]
      %v173 = vld [vmem:[%s1 + $0x6c] sm:$0xf]
      %v174 = vld [vmem:[%s1 + $0x70] sm:$0xf]
      %v175 = vld [vmem:[%s1 + $0x74] sm:$0xf]
      %v176 = vld [vmem:[%s1 + $0x78] sm:$0xf]
      %v177 = vld [vmem:[%s1 + $0x7c] sm:$0xf]
      %v178 = vld [vmem:[%s1 + $0x80] sm:$0xf]
      %v179 = vld [vmem:[%s1 + $0x84] sm:$0xf]
      %v180 = vld [vmem:[%s1 + $0x88] sm:$0xf]
      %v181 = vld [vmem:[%s1 + $0x8c] sm:$0xf]
      %v182 = vld [vmem:[%s1 + $0x90] sm:$0xf]
      %v183 = vld [vmem:[%s1 + $0x94] sm:$0xf]
      %v184 = vld [vmem:[%s1 + $0x98] sm:$0xf]
      %v185 = vld [vmem:[%s1 + $0x9c] sm:$0xf]
      %v186 = vld [vmem:[%s1 + $0xa0] sm:$0xf]
      %v187 = vld [vmem:[%s1 + $0xa4] sm:$0xf]
      %v188 = vld [vmem:[%s1 + $0xa8] sm:$0xf]
      %v189 = vld [vmem:[%s1 + $0xac] sm:$0xf]
      %v190 = vld [vmem:[%s1 + $0xb0] sm:$0xf]
      %v191 = vld [vmem:[%s1 + $0xb4] sm:$0xf]
      %v192 = vld [vmem:[%s1 + $0xb8] sm:$0xf]
      %v193 = vld [vmem:[%s1 + $0xbc] sm:$0xf]
      %v194 = vld [vmem:[%s1 + $0xc0] sm:$0xf]
      %v195 = vld [vmem:[%s1 + $0xc4] sm:$0xf]
      %v196 = vld [vmem:[%s1 + $0xc8] sm:$0xf]
      %v197 = vld [vmem:[%s1 + $0xcc] sm:$0xf]
      %v198 = vld [vmem:[%s1 + $0xd0] sm:$0xf]
      %v199 = vld [vmem:[%s1 + $0xd4] sm:$0xf]
      %v200 = vld [vmem:[%s1 + $0xd8] sm:$0xf]
      %v201 = vld [vmem:[%s1 + $0xdc] sm:$0xf]
      %v202 = vld [vmem:[%s1 + $0xe0] sm:$0xf]
      %v203 = vld [vmem:[%s1 + $0xe4] sm:$0xf]
      %v204 = vld [vmem:[%s1 + $0xe8] sm:$0xf]
      %v205 = vld [vmem:[%s1 + $0xec] sm:$0xf]
      %v206 = vld [vmem:[%s1 + $0xf0] sm:$0xf]
      %v207 = vld [vmem:[%s1 + $0xf4] sm:$0xf]
      %v208 = vld [vmem:[%s1 + $0xf8] sm:$0xf]
      %v209 = vld [vmem:[%s1 + $0xfc] sm:$0xf]
      %s210 = sshra.s32 %s145, 3
      %s211 = sand.u32 %s145, 7
      %s212 = smul.addr %s210, 4
      %s213 = scalar_lea.vmem %s1, %s212
      %v214 = vld [vmem:[%s213] sm:$0xf]
      %v215 = vld [vmem:[%s213 + $0x4] sm:$0xf]
      %v216 = vld [vmem:[%s213 + $0x8] sm:$0xf]
      %v217 = vld [vmem:[%s213 + $0xc] sm:$0xf]
      %v218 = vld [vmem:[%s213 + $0x10] sm:$0xf]
      %v219 = vld [vmem:[%s213 + $0x14] sm:$0xf]
      %v220 = vld [vmem:[%s213 + $0x18] sm:$0xf]
      %v221 = vld [vmem:[%s213 + $0x1c] sm:$0xf]
      %v222 = vld [vmem:[%s213 + $0x20] sm:$0xf]
      %v223 = vld [vmem:[%s213 + $0x24] sm:$0xf]
      %v224 = vld [vmem:[%s213 + $0x28] sm:$0xf]
      %v225 = vld [vmem:[%s213 + $0x2c] sm:$0xf]
      %v226 = vld [vmem:[%s213 + $0x30] sm:$0xf]
      %v227 = vld [vmem:[%s213 + $0x34] sm:$0xf]
      %v228 = vld [vmem:[%s213 + $0x38] sm:$0xf]
      %v229 = vld [vmem:[%s213 + $0x3c] sm:$0xf]
      %v246 = vunpack.c.l.b16 %v214
      %v247 = vunpack.c.l.b16 %v215
      %v248 = vunpack.c.l.b16 %v216
      %v249 = vunpack.c.l.b16 %v217
      %v250 = vunpack.c.l.b16 %v218
      %v251 = vunpack.c.l.b16 %v219
      %v252 = vunpack.c.l.b16 %v220
      %v253 = vunpack.c.l.b16 %v221
      %v254 = vunpack.c.l.b16 %v222
      %v255 = vunpack.c.l.b16 %v223
      %v256 = vunpack.c.l.b16 %v224
      %v257 = vunpack.c.l.b16 %v225
      %v258 = vunpack.c.l.b16 %v226
      %v259 = vunpack.c.l.b16 %v227
      %v260 = vunpack.c.l.b16 %v228
      %v261 = vunpack.c.l.b16 %v229
      %v262 = vpack.c.b16 %v247, %v246
      %v263 = vpack.c.b16 %v249, %v248
      %v264 = vpack.c.b16 %v251, %v250
      %v265 = vpack.c.b16 %v253, %v252
      %v266 = vpack.c.b16 %v255, %v254
      %v267 = vpack.c.b16 %v257, %v256
      %v268 = vpack.c.b16 %v259, %v258
      %v269 = vpack.c.b16 %v261, %v260
      %v342 = vunpack.c.l.b16 %v146
      %v343 = vunpack.c.l.b16 %v147
      %v344 = vunpack.c.l.b16 %v148
      %v345 = vunpack.c.l.b16 %v149
      %v346 = vunpack.c.l.b16 %v150
      %v347 = vunpack.c.l.b16 %v151
      %v348 = vunpack.c.l.b16 %v152
      %v349 = vunpack.c.l.b16 %v153
      %v350 = vunpack.c.l.b16 %v154
      %v351 = vunpack.c.l.b16 %v155
      %v352 = vunpack.c.l.b16 %v156
      %v353 = vunpack.c.l.b16 %v157
      %v354 = vunpack.c.l.b16 %v158
      %v355 = vunpack.c.l.b16 %v159
      %v356 = vunpack.c.l.b16 %v160
      %v357 = vunpack.c.l.b16 %v161
      %v358 = vunpack.c.l.b16 %v162
      %v359 = vunpack.c.l.b16 %v163
      %v360 = vunpack.c.l.b16 %v164
      %v361 = vunpack.c.l.b16 %v165
      %v362 = vunpack.c.l.b16 %v166
      %v363 = vunpack.c.l.b16 %v167
      %v364 = vunpack.c.l.b16 %v168
      %v365 = vunpack.c.l.b16 %v169
      %v366 = vunpack.c.l.b16 %v170
      %v367 = vunpack.c.l.b16 %v171
      %v368 = vunpack.c.l.b16 %v172
      %v369 = vunpack.c.l.b16 %v173
      %v370 = vunpack.c.l.b16 %v174
      %v371 = vunpack.c.l.b16 %v175
      %v372 = vunpack.c.l.b16 %v176
      %v373 = vunpack.c.l.b16 %v177
      %v374 = vunpack.c.l.b16 %v178
      %v375 = vunpack.c.l.b16 %v179
      %v376 = vunpack.c.l.b16 %v180
      %v377 = vunpack.c.l.b16 %v181
      %v378 = vunpack.c.l.b16 %v182
      %v379 = vunpack.c.l.b16 %v183
      %v380 = vunpack.c.l.b16 %v184
      %v381 = vunpack.c.l.b16 %v185
      %v382 = vunpack.c.l.b16 %v186
      %v383 = vunpack.c.l.b16 %v187
      %v384 = vunpack.c.l.b16 %v188
      %v385 = vunpack.c.l.b16 %v189
      %v386 = vunpack.c.l.b16 %v190
      %v387 = vunpack.c.l.b16 %v191
      %v388 = vunpack.c.l.b16 %v192
      %v389 = vunpack.c.l.b16 %v193
      %v390 = vunpack.c.l.b16 %v194
      %v391 = vunpack.c.l.b16 %v195
      %v392 = vunpack.c.l.b16 %v196
      %v393 = vunpack.c.l.b16 %v197
      %v394 = vunpack.c.l.b16 %v198
      %v395 = vunpack.c.l.b16 %v199
      %v396 = vunpack.c.l.b16 %v200
      %v397 = vunpack.c.l.b16 %v201
      %v398 = vunpack.c.l.b16 %v202
      %v399 = vunpack.c.l.b16 %v203
      %v400 = vunpack.c.l.b16 %v204
      %v401 = vunpack.c.l.b16 %v205
      %v402 = vunpack.c.l.b16 %v206
      %v403 = vunpack.c.l.b16 %v207
      %v404 = vunpack.c.l.b16 %v208
      %v405 = vunpack.c.l.b16 %v209
      %v406 = vpack.c.b16 %v343, %v342
      %v407 = vpack.c.b16 %v345, %v344
      %v408 = vpack.c.b16 %v347, %v346
      %v409 = vpack.c.b16 %v349, %v348
      %v410 = vpack.c.b16 %v351, %v350
      %v411 = vpack.c.b16 %v353, %v352
      %v412 = vpack.c.b16 %v355, %v354
      %v413 = vpack.c.b16 %v357, %v356
      %v414 = vpack.c.b16 %v359, %v358
      %v415 = vpack.c.b16 %v361, %v360
      %v416 = vpack.c.b16 %v363, %v362
      %v417 = vpack.c.b16 %v365, %v364
      %v418 = vpack.c.b16 %v367, %v366
      %v419 = vpack.c.b16 %v369, %v368
      %v420 = vpack.c.b16 %v371, %v370
      %v421 = vpack.c.b16 %v373, %v372
      %v422 = vpack.c.b16 %v375, %v374
      %v423 = vpack.c.b16 %v377, %v376
      %v424 = vpack.c.b16 %v379, %v378
      %v425 = vpack.c.b16 %v381, %v380
      %v426 = vpack.c.b16 %v383, %v382
      %v427 = vpack.c.b16 %v385, %v384
      %v428 = vpack.c.b16 %v387, %v386
      %v429 = vpack.c.b16 %v389, %v388
      %v430 = vpack.c.b16 %v391, %v390
      %v431 = vpack.c.b16 %v393, %v392
      %v432 = vpack.c.b16 %v395, %v394
      %v433 = vpack.c.b16 %v397, %v396
      %v434 = vpack.c.b16 %v399, %v398
      %v435 = vpack.c.b16 %v401, %v400
      %v436 = vpack.c.b16 %v403, %v402
      %v437 = vpack.c.b16 %v405, %v404
      %470 = vmatprep.subr.bf16.mxu0 0
      %471 = vmatpush1.bf16.xpose.msra.mxu0 %v406
      %472 = vmatprep.subr.bf16.mxu0 0
      %473 = vmatpush1.bf16.xpose.msra.mxu0 %v407
      %474 = vmatprep.subr.bf16.mxu0 0
      %475 = vmatpush1.bf16.xpose.msra.mxu0 %v408
      %476 = vmatprep.subr.bf16.mxu0 0
      %477 = vmatpush1.bf16.xpose.msra.mxu0 %v409
      %478 = vmatprep.subr.bf16.mxu0 0
      %479 = vmatpush1.bf16.xpose.msra.mxu0 %v410
      %480 = vmatprep.subr.bf16.mxu0 0
      %481 = vmatpush1.bf16.xpose.msra.mxu0 %v411
      %482 = vmatprep.subr.bf16.mxu0 0
      %483 = vmatpush1.bf16.xpose.msra.mxu0 %v412
      %484 = vmatprep.subr.bf16.mxu0 0
      %485 = vmatpush1.bf16.xpose.msra.mxu0 %v413
      %486 = vmatprep.subr.bf16.mxu0 0
      %487 = vmatpush1.bf16.xpose.msra.mxu0 %v414
      %488 = vmatprep.subr.bf16.mxu0 0
      %489 = vmatpush1.bf16.xpose.msra.mxu0 %v415
      %490 = vmatprep.subr.bf16.mxu0 0
      %491 = vmatpush1.bf16.xpose.msra.mxu0 %v416
      %492 = vmatprep.subr.bf16.mxu0 0
      %493 = vmatpush1.bf16.xpose.msra.mxu0 %v417
      %494 = vmatprep.subr.bf16.mxu0 0
      %495 = vmatpush1.bf16.xpose.msra.mxu0 %v418
      %496 = vmatprep.subr.bf16.mxu0 0
      %497 = vmatpush1.bf16.xpose.msra.mxu0 %v419
      %498 = vmatprep.subr.bf16.mxu0 0
      %499 = vmatpush1.bf16.xpose.msra.mxu0 %v420
      %500 = vmatprep.subr.bf16.mxu0 0
      %501 = vmatpush1.bf16.xpose.msra.mxu0 %v421
      %502 = vmatprep.mubr.bf16.mxu0 0
      %503 = vmatmul.mubr.bf16.gmra.mrb[0].mxu0 %v262
      %v504 = vpop.f32.mrb[0].mxu0
      %v505 = vadd.f32 0.0, %v504
      %v506 = vpop.f32.mrb[0].mxu0
      %v507 = vadd.f32 0.0, %v506
      %v508 = vpop.f32.mrb[0].mxu0
      %v509 = vadd.f32 0.0, %v508
      %v510 = vpop.f32.mrb[0].mxu0
      %v511 = vadd.f32 0.0, %v510
      %512 = vmatprep.mubr.bf16.mxu0 0
      %513 = vmatmul.mubr.bf16.gmra.mrb[0].mxu0 %v263
      %v514 = vpop.f32.mrb[0].mxu0
      %v515 = vadd.f32 0.0, %v514
      %v516 = vpop.f32.mrb[0].mxu0
      %v517 = vadd.f32 0.0, %v516
      %v518 = vpop.f32.mrb[0].mxu0
      %v519 = vadd.f32 0.0, %v518
      %v520 = vpop.f32.mrb[0].mxu0
      %v521 = vadd.f32 0.0, %v520
      %522 = vmatprep.mubr.bf16.mxu0 0
      %523 = vmatmul.mubr.bf16.gmra.mrb[0].mxu0 %v264
      %v524 = vpop.f32.mrb[0].mxu0
      %v525 = vadd.f32 0.0, %v524
      %v526 = vpop.f32.mrb[0].mxu0
      %v527 = vadd.f32 0.0, %v526
      %v528 = vpop.f32.mrb[0].mxu0
      %v529 = vadd.f32 0.0, %v528
      %v530 = vpop.f32.mrb[0].mxu0
      %v531 = vadd.f32 0.0, %v530
      %532 = vmatprep.mubr.bf16.mxu0 0
      %533 = vmatmul.mubr.bf16.gmra.mrb[0].mxu0 %v265
      %v534 = vpop.f32.mrb[0].mxu0
      %v535 = vadd.f32 0.0, %v534
      %v536 = vpop.f32.mrb[0].mxu0
      %v537 = vadd.f32 0.0, %v536
      %v538 = vpop.f32.mrb[0].mxu0
      %v539 = vadd.f32 0.0, %v538
      %v540 = vpop.f32.mrb[0].mxu0
      %v541 = vadd.f32 0.0, %v540
      %542 = vmatprep.mubr.bf16.mxu0 0
      %543 = vmatmul.mubr.bf16.gmra.mrb[0].mxu0 %v266
      %v544 = vpop.f32.mrb[0].mxu0
      %v545 = vadd.f32 0.0, %v544
      %v546 = vpop.f32.mrb[0].mxu0
      %v547 = vadd.f32 0.0, %v546
      %v548 = vpop.f32.mrb[0].mxu0
      %v549 = vadd.f32 0.0, %v548
      %v550 = vpop.f32.mrb[0].mxu0
      %v551 = vadd.f32 0.0, %v550
      %552 = vmatprep.mubr.bf16.mxu0 0
      %553 = vmatmul.mubr.bf16.gmra.mrb[0].mxu0 %v267
      %v554 = vpop.f32.mrb[0].mxu0
      %v555 = vadd.f32 0.0, %v554
      %v556 = vpop.f32.mrb[0].mxu0
      %v557 = vadd.f32 0.0, %v556
      %v558 = vpop.f32.mrb[0].mxu0
      %v559 = vadd.f32 0.0, %v558
      %v560 = vpop.f32.mrb[0].mxu0
      %v561 = vadd.f32 0.0, %v560
      %562 = vmatprep.mubr.bf16.mxu0 0
      %563 = vmatmul.mubr.bf16.gmra.mrb[0].mxu0 %v268
      %v564 = vpop.f32.mrb[0].mxu0
      %v565 = vadd.f32 0.0, %v564
      %v566 = vpop.f32.mrb[0].mxu0
      %v567 = vadd.f32 0.0, %v566
      %v568 = vpop.f32.mrb[0].mxu0
      %v569 = vadd.f32 0.0, %v568
      %v570 = vpop.f32.mrb[0].mxu0
      %v571 = vadd.f32 0.0, %v570
      %572 = vmatprep.mubr.bf16.mxu0 0
      %573 = vmatmul.mubr.bf16.gmra.mrb[0].mxu0 %v269
      %v574 = vpop.f32.mrb[0].mxu0
      %v575 = vadd.f32 0.0, %v574
      %v576 = vpop.f32.mrb[0].mxu0
      %v577 = vadd.f32 0.0, %v576
      %v578 = vpop.f32.mrb[0].mxu0
      %v579 = vadd.f32 0.0, %v578
      %v580 = vpop.f32.mrb[0].mxu0
      %v581 = vadd.f32 0.0, %v580
      %582 = vdwg.mxu0
      %583 = vmatprep.subr.bf16.mxu0 0
      %584 = vmatpush1.bf16.xpose.msra.mxu0 %v422
      %585 = vmatprep.subr.bf16.mxu0 0
      %586 = vmatpush1.bf16.xpose.msra.mxu0 %v423
      %587 = vmatprep.subr.bf16.mxu0 0
      %588 = vmatpush1.bf16.xpose.msra.mxu0 %v424
      %589 = vmatprep.subr.bf16.mxu0 0
      %590 = vmatpush1.bf16.xpose.msra.mxu0 %v425
      %591 = vmatprep.subr.bf16.mxu0 0
      %592 = vmatpush1.bf16.xpose.msra.mxu0 %v426
      %593 = vmatprep.subr.bf16.mxu0 0
      %594 = vmatpush1.bf16.xpose.msra.mxu0 %v427
      %595 = vmatprep.subr.bf16.mxu0 0
      %596 = vmatpush1.bf16.xpose.msra.mxu0 %v428
      %597 = vmatprep.subr.bf16.mxu0 0
      %598 = vmatpush1.bf16.xpose.msra.mxu0 %v429
      %599 = vmatprep.subr.bf16.mxu0 0
      %600 = vmatpush1.bf16.xpose.msra.mxu0 %v430
      %601 = vmatprep.subr.bf16.mxu0 0
      %602 = vmatpush1.bf16.xpose.msra.mxu0 %v431
      %603 = vmatprep.subr.bf16.mxu0 0
      %604 = vmatpush1.bf16.xpose.msra.mxu0 %v432
      %605 = vmatprep.subr.bf16.mxu0 0
      %606 = vmatpush1.bf16.xpose.msra.mxu0 %v433
      %607 = vmatprep.subr.bf16.mxu0 0
      %608 = vmatpush1.bf16.xpose.msra.mxu0 %v434
      %609 = vmatprep.subr.bf16.mxu0 0
      %610 = vmatpush1.bf16.xpose.msra.mxu0 %v435
      %611 = vmatprep.subr.bf16.mxu0 0
      %612 = vmatpush1.bf16.xpose.msra.mxu0 %v436
      %613 = vmatprep.subr.bf16.mxu0 0
      %614 = vmatpush1.bf16.xpose.msra.mxu0 %v437
      %615 = vmatprep.mubr.bf16.mxu0 0
      %616 = vmatmul.mubr.bf16.gmra.mrb[0].mxu0 %v262
      %v617 = vpop.f32.mrb[0].mxu0
      %v618 = vadd.f32 0.0, %v617
      %v619 = vpop.f32.mrb[0].mxu0
      %v620 = vadd.f32 0.0, %v619
      %v621 = vpop.f32.mrb[0].mxu0
      %v622 = vadd.f32 0.0, %v621
      %v623 = vpop.f32.mrb[0].mxu0
      %v624 = vadd.f32 0.0, %v623
      %625 = vmatprep.mubr.bf16.mxu0 0
      %626 = vmatmul.mubr.bf16.gmra.mrb[0].mxu0 %v263
      %v627 = vpop.f32.mrb[0].mxu0
      %v628 = vadd.f32 0.0, %v627
      %v629 = vpop.f32.mrb[0].mxu0
      %v630 = vadd.f32 0.0, %v629
      %v631 = vpop.f32.mrb[0].mxu0
      %v632 = vadd.f32 0.0, %v631
      %v633 = vpop.f32.mrb[0].mxu0
      %v634 = vadd.f32 0.0, %v633
      %635 = vmatprep.mubr.bf16.mxu0 0
      %636 = vmatmul.mubr.bf16.gmra.mrb[0].mxu0 %v264
      %v637 = vpop.f32.mrb[0].mxu0
      %v638 = vadd.f32 0.0, %v637
      %v639 = vpop.f32.mrb[0].mxu0
      %v640 = vadd.f32 0.0, %v639
      %v641 = vpop.f32.mrb[0].mxu0
      %v642 = vadd.f32 0.0, %v641
      %v643 = vpop.f32.mrb[0].mxu0
      %v644 = vadd.f32 0.0, %v643
      %645 = vmatprep.mubr.bf16.mxu0 0
      %646 = vmatmul.mubr.bf16.gmra.mrb[0].mxu0 %v265
      %v647 = vpop.f32.mrb[0].mxu0
      %v648 = vadd.f32 0.0, %v647
      %v649 = vpop.f32.mrb[0].mxu0
      %v650 = vadd.f32 0.0, %v649
      %v651 = vpop.f32.mrb[0].mxu0
      %v652 = vadd.f32 0.0, %v651
      %v653 = vpop.f32.mrb[0].mxu0
      %v654 = vadd.f32 0.0, %v653
      %655 = vmatprep.mubr.bf16.mxu0 0
      %656 = vmatmul.mubr.bf16.gmra.mrb[0].mxu0 %v266
      %v657 = vpop.f32.mrb[0].mxu0
      %v658 = vadd.f32 0.0, %v657
      %v659 = vpop.f32.mrb[0].mxu0
      %v660 = vadd.f32 0.0, %v659
      %v661 = vpop.f32.mrb[0].mxu0
      %v662 = vadd.f32 0.0, %v661
      %v663 = vpop.f32.mrb[0].mxu0
      %v664 = vadd.f32 0.0, %v663
      %665 = vmatprep.mubr.bf16.mxu0 0
      %666 = vmatmul.mubr.bf16.gmra.mrb[0].mxu0 %v267
      %v667 = vpop.f32.mrb[0].mxu0
      %v668 = vadd.f32 0.0, %v667
      %v669 = vpop.f32.mrb[0].mxu0
      %v670 = vadd.f32 0.0, %v669
      %v671 = vpop.f32.mrb[0].mxu0
      %v672 = vadd.f32 0.0, %v671
      %v673 = vpop.f32.mrb[0].mxu0
      %v674 = vadd.f32 0.0, %v673
      %675 = vmatprep.mubr.bf16.mxu0 0
      %676 = vmatmul.mubr.bf16.gmra.mrb[0].mxu0 %v268
      %v677 = vpop.f32.mrb[0].mxu0
      %v678 = vadd.f32 0.0, %v677
      %v679 = vpop.f32.mrb[0].mxu0
      %v680 = vadd.f32 0.0, %v679
      %v681 = vpop.f32.mrb[0].mxu0
      %v682 = vadd.f32 0.0, %v681
      %v683 = vpop.f32.mrb[0].mxu0
      %v684 = vadd.f32 0.0, %v683
      %685 = vmatprep.mubr.bf16.mxu0 0
      %686 = vmatmul.mubr.bf16.gmra.mrb[0].mxu0 %v269
      %v687 = vpop.f32.mrb[0].mxu0
      %v688 = vadd.f32 0.0, %v687
      %v689 = vpop.f32.mrb[0].mxu0
      %v690 = vadd.f32 0.0, %v689
      %v691 = vpop.f32.mrb[0].mxu0
      %v692 = vadd.f32 0.0, %v691
      %v693 = vpop.f32.mrb[0].mxu0
      %v694 = vadd.f32 0.0, %v693
      %695 = vdwg.mxu0
      %v696 = vmul.f32 %v505, 10.0
      %v697 = vmul.f32 %v507, 10.0
      %v698 = vmul.f32 %v618, 10.0
      %v699 = vmul.f32 %v620, 10.0
      %v700 = vmul.f32 %v509, 10.0
      %v701 = vmul.f32 %v511, 10.0
      %v702 = vmul.f32 %v622, 10.0
      %v703 = vmul.f32 %v624, 10.0
      %v704 = vmul.f32 %v515, 10.0
      %v705 = vmul.f32 %v517, 10.0
      %v706 = vmul.f32 %v628, 10.0
      %v707 = vmul.f32 %v630, 10.0
      %v708 = vmul.f32 %v519, 10.0
      %v709 = vmul.f32 %v521, 10.0
      %v710 = vmul.f32 %v632, 10.0
      %v711 = vmul.f32 %v634, 10.0
      %v712 = vmul.f32 %v525, 10.0
      %v713 = vmul.f32 %v527, 10.0
      %v714 = vmul.f32 %v638, 10.0
      %v715 = vmul.f32 %v640, 10.0
      %v716 = vmul.f32 %v529, 10.0
      %v717 = vmul.f32 %v531, 10.0
      %v718 = vmul.f32 %v642, 10.0
      %v719 = vmul.f32 %v644, 10.0
      %v720 = vmul.f32 %v535, 10.0
      %v721 = vmul.f32 %v537, 10.0
      %v722 = vmul.f32 %v648, 10.0
      %v723 = vmul.f32 %v650, 10.0
      %v724 = vmul.f32 %v539, 10.0
      %v725 = vmul.f32 %v541, 10.0
      %v726 = vmul.f32 %v652, 10.0
      %v727 = vmul.f32 %v654, 10.0
      %v728 = vmul.f32 %v545, 10.0
      %v729 = vmul.f32 %v547, 10.0
      %v730 = vmul.f32 %v658, 10.0
      %v731 = vmul.f32 %v660, 10.0
      %v732 = vmul.f32 %v549, 10.0
      %v733 = vmul.f32 %v551, 10.0
      %v734 = vmul.f32 %v662, 10.0
      %v735 = vmul.f32 %v664, 10.0
      %v736 = vmul.f32 %v555, 10.0
      %v737 = vmul.f32 %v557, 10.0
      %v738 = vmul.f32 %v668, 10.0
      %v739 = vmul.f32 %v670, 10.0
      %v740 = vmul.f32 %v559, 10.0
      %v741 = vmul.f32 %v561, 10.0
      %v742 = vmul.f32 %v672, 10.0
      %v743 = vmul.f32 %v674, 10.0
      %v744 = vmul.f32 %v565, 10.0
      %v745 = vmul.f32 %v567, 10.0
      %v746 = vmul.f32 %v678, 10.0
      %v747 = vmul.f32 %v680, 10.0
      %v748 = vmul.f32 %v569, 10.0
      %v749 = vmul.f32 %v571, 10.0
      %v750 = vmul.f32 %v682, 10.0
      %v751 = vmul.f32 %v684, 10.0
      %v752 = vmul.f32 %v575, 10.0
      %v753 = vmul.f32 %v577, 10.0
      %v754 = vmul.f32 %v688, 10.0
      %v755 = vmul.f32 %v690, 10.0
      %v756 = vmul.f32 %v579, 10.0
      %v757 = vmul.f32 %v581, 10.0
      %v758 = vmul.f32 %v692, 10.0
      %v759 = vmul.f32 %v694, 10.0
      %v760 = vmul.f32 %v696, 1.442695
      %v761 = vpow.pop %v760
      %v762 = vmul.f32 %v697, 1.442695
      %v763 = vpow.pop %v762
      %v764 = vmul.f32 %v698, 1.442695
      %v765 = vpow.pop %v764
      %v766 = vmul.f32 %v699, 1.442695
      %v767 = vpow.pop %v766
      %v768 = vmul.f32 %v700, 1.442695
      %v769 = vpow.pop %v768
      %v770 = vmul.f32 %v701, 1.442695
      %v771 = vpow.pop %v770
      %v772 = vmul.f32 %v702, 1.442695
      %v773 = vpow.pop %v772
      %v774 = vmul.f32 %v703, 1.442695
      %v775 = vpow.pop %v774
      %v776 = vmul.f32 %v704, 1.442695
      %v777 = vpow.pop %v776
      %v778 = vmul.f32 %v705, 1.442695
      %v779 = vpow.pop %v778
      %v780 = vmul.f32 %v706, 1.442695
      %v781 = vpow.pop %v780
      %v782 = vmul.f32 %v707, 1.442695
      %v783 = vpow.pop %v782
      %v784 = vmul.f32 %v708, 1.442695
      %v785 = vpow.pop %v784
      %v786 = vmul.f32 %v709, 1.442695
      %v787 = vpow.pop %v786
      %v788 = vmul.f32 %v710, 1.442695
      %v789 = vpow.pop %v788
      %v790 = vmul.f32 %v711, 1.442695
      %v791 = vpow.pop %v790
      %v792 = vmul.f32 %v712, 1.442695
      %v793 = vpow.pop %v792
      %v794 = vmul.f32 %v713, 1.442695
      %v795 = vpow.pop %v794
      %v796 = vmul.f32 %v714, 1.442695
      %v797 = vpow.pop %v796
      %v798 = vmul.f32 %v715, 1.442695
      %v799 = vpow.pop %v798
      %v800 = vmul.f32 %v716, 1.442695
      %v801 = vpow.pop %v800
      %v802 = vmul.f32 %v717, 1.442695
      %v803 = vpow.pop %v802
      %v804 = vmul.f32 %v718, 1.442695
      %v805 = vpow.pop %v804
      %v806 = vmul.f32 %v719, 1.442695
      %v807 = vpow.pop %v806
      %v808 = vmul.f32 %v720, 1.442695
      %v809 = vpow.pop %v808
      %v810 = vmul.f32 %v721, 1.442695
      %v811 = vpow.pop %v810
      %v812 = vmul.f32 %v722, 1.442695
      %v813 = vpow.pop %v812
      %v814 = vmul.f32 %v723, 1.442695
      %v815 = vpow.pop %v814
      %v816 = vmul.f32 %v724, 1.442695
      %v817 = vpow.pop %v816
      %v818 = vmul.f32 %v725, 1.442695
      %v819 = vpow.pop %v818
      %v820 = vmul.f32 %v726, 1.442695
      %v821 = vpow.pop %v820
      %v822 = vmul.f32 %v727, 1.442695
      %v823 = vpow.pop %v822
      %v824 = vmul.f32 %v728, 1.442695
      %v825 = vpow.pop %v824
      %v826 = vmul.f32 %v729, 1.442695
      %v827 = vpow.pop %v826
      %v828 = vmul.f32 %v730, 1.442695
      %v829 = vpow.pop %v828
      %v830 = vmul.f32 %v731, 1.442695
      %v831 = vpow.pop %v830
      %v832 = vmul.f32 %v732, 1.442695
      %v833 = vpow.pop %v832
      %v834 = vmul.f32 %v733, 1.442695
      %v835 = vpow.pop %v834
      %v836 = vmul.f32 %v734, 1.442695
      %v837 = vpow.pop %v836
      %v838 = vmul.f32 %v735, 1.442695
      %v839 = vpow.pop %v838
      %v840 = vmul.f32 %v736, 1.442695
      %v841 = vpow.pop %v840
      %v842 = vmul.f32 %v737, 1.442695
      %v843 = vpow.pop %v842
      %v844 = vmul.f32 %v738, 1.442695
      %v845 = vpow.pop %v844
      %v846 = vmul.f32 %v739, 1.442695
      %v847 = vpow.pop %v846
      %v848 = vmul.f32 %v740, 1.442695
      %v849 = vpow.pop %v848
      %v850 = vmul.f32 %v741, 1.442695
      %v851 = vpow.pop %v850
      %v852 = vmul.f32 %v742, 1.442695
      %v853 = vpow.pop %v852
      %v854 = vmul.f32 %v743, 1.442695
      %v855 = vpow.pop %v854
      %v856 = vmul.f32 %v744, 1.442695
      %v857 = vpow.pop %v856
      %v858 = vmul.f32 %v745, 1.442695
      %v859 = vpow.pop %v858
      %v860 = vmul.f32 %v746, 1.442695
      %v861 = vpow.pop %v860
      %v862 = vmul.f32 %v747, 1.442695
      %v863 = vpow.pop %v862
      %v864 = vmul.f32 %v748, 1.442695
      %v865 = vpow.pop %v864
      %v866 = vmul.f32 %v749, 1.442695
      %v867 = vpow.pop %v866
      %v868 = vmul.f32 %v750, 1.442695
      %v869 = vpow.pop %v868
      %v870 = vmul.f32 %v751, 1.442695
      %v871 = vpow.pop %v870
      %v872 = vmul.f32 %v752, 1.442695
      %v873 = vpow.pop %v872
      %v874 = vmul.f32 %v753, 1.442695
      %v875 = vpow.pop %v874
      %v876 = vmul.f32 %v754, 1.442695
      %v877 = vpow.pop %v876
      %v878 = vmul.f32 %v755, 1.442695
      %v879 = vpow.pop %v878
      %v880 = vmul.f32 %v756, 1.442695
      %v881 = vpow.pop %v880
      %v882 = vmul.f32 %v757, 1.442695
      %v883 = vpow.pop %v882
      %v884 = vmul.f32 %v758, 1.442695
      %v885 = vpow.pop %v884
      %v886 = vmul.f32 %v759, 1.442695
      %v887 = vpow.pop %v886
      %v888 = vlaneseq
      %v889 = vshrl.u32 %v888, 7
      %v890 = vadd.s32 %v889, 8
      %v891 = vadd.s32 %v889, 16
      %v892 = vadd.s32 %v889, 24
      %v893 = vadd.s32 %v889, 32
      %v894 = vadd.s32 %v889, 40
      %v895 = vadd.s32 %v889, 48
      %v896 = vadd.s32 %v889, 56
      %v897 = vadd.s32 %v889, 64
      %v898 = vadd.s32 %v889, 72
      %v899 = vadd.s32 %v889, 80
      %v900 = vadd.s32 %v889, 88
      %v901 = vadd.s32 %v889, 96
      %v902 = vadd.s32 %v889, 104
      %v903 = vadd.s32 %v889, 112
      %v904 = vadd.s32 %v889, 120
      %v905 = vlaneseq
      %v906 = vand.u32 %v905, 127
      %v907 = vadd.s32 %v906, 128
      %v908 = vadd.s32 %v906, 256
      %v909 = vadd.s32 %v906, 384
      %v910 = vstv %s145
      %v911 = vadd.s32 %v889, %v910
      %v912 = vadd.s32 %v890, %v910
      %v913 = vadd.s32 %v891, %v910
      %v914 = vadd.s32 %v892, %v910
      %v915 = vadd.s32 %v893, %v910
      %v916 = vadd.s32 %v894, %v910
      %v917 = vadd.s32 %v895, %v910
      %v918 = vadd.s32 %v896, %v910
      %v919 = vadd.s32 %v897, %v910
      %v920 = vadd.s32 %v898, %v910
      %v921 = vadd.s32 %v899, %v910
      %v922 = vadd.s32 %v900, %v910
      %v923 = vadd.s32 %v901, %v910
      %v924 = vadd.s32 %v902, %v910
      %v925 = vadd.s32 %v903, %v910
      %v926 = vadd.s32 %v904, %v910
      %vm927 = vcmp.eq.s32.totalorder %v906, %v911
      %vm928 = vcmp.eq.s32.totalorder %v907, %v911
      %vm929 = vcmp.eq.s32.totalorder %v908, %v911
      %vm930 = vcmp.eq.s32.totalorder %v909, %v911
      %vm931 = vcmp.eq.s32.totalorder %v906, %v912
      %vm932 = vcmp.eq.s32.totalorder %v907, %v912
      %vm933 = vcmp.eq.s32.totalorder %v908, %v912
      %vm934 = vcmp.eq.s32.totalorder %v909, %v912
      %vm935 = vcmp.eq.s32.totalorder %v906, %v913
      %vm936 = vcmp.eq.s32.totalorder %v907, %v913
      %vm937 = vcmp.eq.s32.totalorder %v908, %v913
      %vm938 = vcmp.eq.s32.totalorder %v909, %v913
      %vm939 = vcmp.eq.s32.totalorder %v906, %v914
      %vm940 = vcmp.eq.s32.totalorder %v907, %v914
      %vm941 = vcmp.eq.s32.totalorder %v908, %v914
      %vm942 = vcmp.eq.s32.totalorder %v909, %v914
      %vm943 = vcmp.eq.s32.totalorder %v906, %v915
      %vm944 = vcmp.eq.s32.totalorder %v907, %v915
      %vm945 = vcmp.eq.s32.totalorder %v908, %v915
      %vm946 = vcmp.eq.s32.totalorder %v909, %v915
      %vm947 = vcmp.eq.s32.totalorder %v906, %v916
      %vm948 = vcmp.eq.s32.totalorder %v907, %v916
      %vm949 = vcmp.eq.s32.totalorder %v908, %v916
      %vm950 = vcmp.eq.s32.totalorder %v909, %v916
      %vm951 = vcmp.eq.s32.totalorder %v906, %v917
      %vm952 = vcmp.eq.s32.totalorder %v907, %v917
      %vm953 = vcmp.eq.s32.totalorder %v908, %v917
      %vm954 = vcmp.eq.s32.totalorder %v909, %v917
      %vm955 = vcmp.eq.s32.totalorder %v906, %v918
      %vm956 = vcmp.eq.s32.totalorder %v907, %v918
      %vm957 = vcmp.eq.s32.totalorder %v908, %v918
      %vm958 = vcmp.eq.s32.totalorder %v909, %v918
      %vm959 = vcmp.eq.s32.totalorder %v906, %v919
      %vm960 = vcmp.eq.s32.totalorder %v907, %v919
      %vm961 = vcmp.eq.s32.totalorder %v908, %v919
      %vm962 = vcmp.eq.s32.totalorder %v909, %v919
      %vm963 = vcmp.eq.s32.totalorder %v906, %v920
      %vm964 = vcmp.eq.s32.totalorder %v907, %v920
      %vm965 = vcmp.eq.s32.totalorder %v908, %v920
      %vm966 = vcmp.eq.s32.totalorder %v909, %v920
      %vm967 = vcmp.eq.s32.totalorder %v906, %v921
      %vm968 = vcmp.eq.s32.totalorder %v907, %v921
      %vm969 = vcmp.eq.s32.totalorder %v908, %v921
      %vm970 = vcmp.eq.s32.totalorder %v909, %v921
      %vm971 = vcmp.eq.s32.totalorder %v906, %v922
      %vm972 = vcmp.eq.s32.totalorder %v907, %v922
      %vm973 = vcmp.eq.s32.totalorder %v908, %v922
      %vm974 = vcmp.eq.s32.totalorder %v909, %v922
      %vm975 = vcmp.eq.s32.totalorder %v906, %v923
      %vm976 = vcmp.eq.s32.totalorder %v907, %v923
      %vm977 = vcmp.eq.s32.totalorder %v908, %v923
      %vm978 = vcmp.eq.s32.totalorder %v909, %v923
      %vm979 = vcmp.eq.s32.totalorder %v906, %v924
      %vm980 = vcmp.eq.s32.totalorder %v907, %v924
      %vm981 = vcmp.eq.s32.totalorder %v908, %v924
      %vm982 = vcmp.eq.s32.totalorder %v909, %v924
      %vm983 = vcmp.eq.s32.totalorder %v906, %v925
      %vm984 = vcmp.eq.s32.totalorder %v907, %v925
      %vm985 = vcmp.eq.s32.totalorder %v908, %v925
      %vm986 = vcmp.eq.s32.totalorder %v909, %v925
      %vm987 = vcmp.eq.s32.totalorder %v906, %v926
      %vm988 = vcmp.eq.s32.totalorder %v907, %v926
      %vm989 = vcmp.eq.s32.totalorder %v908, %v926
      %vm990 = vcmp.eq.s32.totalorder %v909, %v926
      %v991 = vsel %vm927, 0.0, %v761
      %v992 = vsel %vm928, 0.0, %v763
      %v993 = vsel %vm929, 0.0, %v765
      %v994 = vsel %vm930, 0.0, %v767
      %v995 = vsel %vm931, 0.0, %v769
      %v996 = vsel %vm932, 0.0, %v771
      %v997 = vsel %vm933, 0.0, %v773
      %v998 = vsel %vm934, 0.0, %v775
      %v999 = vsel %vm935, 0.0, %v777
      %v1000 = vsel %vm936, 0.0, %v779
      %v1001 = vsel %vm937, 0.0, %v781
      %v1002 = vsel %vm938, 0.0, %v783
      %v1003 = vsel %vm939, 0.0, %v785
      %v1004 = vsel %vm940, 0.0, %v787
      %v1005 = vsel %vm941, 0.0, %v789
      %v1006 = vsel %vm942, 0.0, %v791
      %v1007 = vsel %vm943, 0.0, %v793
      %v1008 = vsel %vm944, 0.0, %v795
      %v1009 = vsel %vm945, 0.0, %v797
      %v1010 = vsel %vm946, 0.0, %v799
      %v1011 = vsel %vm947, 0.0, %v801
      %v1012 = vsel %vm948, 0.0, %v803
      %v1013 = vsel %vm949, 0.0, %v805
      %v1014 = vsel %vm950, 0.0, %v807
      %v1015 = vsel %vm951, 0.0, %v809
      %v1016 = vsel %vm952, 0.0, %v811
      %v1017 = vsel %vm953, 0.0, %v813
      %v1018 = vsel %vm954, 0.0, %v815
      %v1019 = vsel %vm955, 0.0, %v817
      %v1020 = vsel %vm956, 0.0, %v819
      %v1021 = vsel %vm957, 0.0, %v821
      %v1022 = vsel %vm958, 0.0, %v823
      %v1023 = vsel %vm959, 0.0, %v825
      %v1024 = vsel %vm960, 0.0, %v827
      %v1025 = vsel %vm961, 0.0, %v829
      %v1026 = vsel %vm962, 0.0, %v831
      %v1027 = vsel %vm963, 0.0, %v833
      %v1028 = vsel %vm964, 0.0, %v835
      %v1029 = vsel %vm965, 0.0, %v837
      %v1030 = vsel %vm966, 0.0, %v839
      %v1031 = vsel %vm967, 0.0, %v841
      %v1032 = vsel %vm968, 0.0, %v843
      %v1033 = vsel %vm969, 0.0, %v845
      %v1034 = vsel %vm970, 0.0, %v847
      %v1035 = vsel %vm971, 0.0, %v849
      %v1036 = vsel %vm972, 0.0, %v851
      %v1037 = vsel %vm973, 0.0, %v853
      %v1038 = vsel %vm974, 0.0, %v855
      %v1039 = vsel %vm975, 0.0, %v857
      %v1040 = vsel %vm976, 0.0, %v859
      %v1041 = vsel %vm977, 0.0, %v861
      %v1042 = vsel %vm978, 0.0, %v863
      %v1043 = vsel %vm979, 0.0, %v865
      %v1044 = vsel %vm980, 0.0, %v867
      %v1045 = vsel %vm981, 0.0, %v869
      %v1046 = vsel %vm982, 0.0, %v871
      %v1047 = vsel %vm983, 0.0, %v873
      %v1048 = vsel %vm984, 0.0, %v875
      %v1049 = vsel %vm985, 0.0, %v877
      %v1050 = vsel %vm986, 0.0, %v879
      %v1051 = vsel %vm987, 0.0, %v881
      %v1052 = vsel %vm988, 0.0, %v883
      %v1053 = vsel %vm989, 0.0, %v885
      %v1054 = vsel %vm990, 0.0, %v887
      %v1055 = vadd.f32 %v991, %v992
      %v1056 = vadd.f32 %v1055, %v993
      %v1057 = vadd.f32 %v1056, %v994
      %1058 = vadd.xlane.f32.xlu0 %v1057
      %v1059 = vpop.xlane.xlu0 %1058
      %v1060 = vadd.f32 %v995, %v996
      %v1061 = vadd.f32 %v1060, %v997
      %v1062 = vadd.f32 %v1061, %v998
      %1063 = vadd.xlane.f32.xlu0 %v1062
      %v1064 = vpop.xlane.xlu0 %1063
      %v1065 = vadd.f32 %v999, %v1000
      %v1066 = vadd.f32 %v1065, %v1001
      %v1067 = vadd.f32 %v1066, %v1002
      %1068 = vadd.xlane.f32.xlu0 %v1067
      %v1069 = vpop.xlane.xlu0 %1068
      %v1070 = vadd.f32 %v1003, %v1004
      %v1071 = vadd.f32 %v1070, %v1005
      %v1072 = vadd.f32 %v1071, %v1006
      %1073 = vadd.xlane.f32.xlu0 %v1072
      %v1074 = vpop.xlane.xlu0 %1073
      %v1075 = vadd.f32 %v1007, %v1008
      %v1076 = vadd.f32 %v1075, %v1009
      %v1077 = vadd.f32 %v1076, %v1010
      %1078 = vadd.xlane.f32.xlu0 %v1077
      %v1079 = vpop.xlane.xlu0 %1078
      %v1080 = vadd.f32 %v1011, %v1012
      %v1081 = vadd.f32 %v1080, %v1013
      %v1082 = vadd.f32 %v1081, %v1014
      %1083 = vadd.xlane.f32.xlu0 %v1082
      %v1084 = vpop.xlane.xlu0 %1083
      %v1085 = vadd.f32 %v1015, %v1016
      %v1086 = vadd.f32 %v1085, %v1017
      %v1087 = vadd.f32 %v1086, %v1018
      %1088 = vadd.xlane.f32.xlu0 %v1087
      %v1089 = vpop.xlane.xlu0 %1088
      %v1090 = vadd.f32 %v1019, %v1020
      %v1091 = vadd.f32 %v1090, %v1021
      %v1092 = vadd.f32 %v1091, %v1022
      %1093 = vadd.xlane.f32.xlu0 %v1092
      %v1094 = vpop.xlane.xlu0 %1093
      %v1095 = vadd.f32 %v1023, %v1024
      %v1096 = vadd.f32 %v1095, %v1025
      %v1097 = vadd.f32 %v1096, %v1026
      %1098 = vadd.xlane.f32.xlu0 %v1097
      %v1099 = vpop.xlane.xlu0 %1098
      %v1100 = vadd.f32 %v1027, %v1028
      %v1101 = vadd.f32 %v1100, %v1029
      %v1102 = vadd.f32 %v1101, %v1030
      %1103 = vadd.xlane.f32.xlu0 %v1102
      %v1104 = vpop.xlane.xlu0 %1103
      %v1105 = vadd.f32 %v1031, %v1032
      %v1106 = vadd.f32 %v1105, %v1033
      %v1107 = vadd.f32 %v1106, %v1034
      %1108 = vadd.xlane.f32.xlu0 %v1107
      %v1109 = vpop.xlane.xlu0 %1108
      %v1110 = vadd.f32 %v1035, %v1036
      %v1111 = vadd.f32 %v1110, %v1037
      %v1112 = vadd.f32 %v1111, %v1038
      %1113 = vadd.xlane.f32.xlu0 %v1112
      %v1114 = vpop.xlane.xlu0 %1113
      %v1115 = vadd.f32 %v1039, %v1040
      %v1116 = vadd.f32 %v1115, %v1041
      %v1117 = vadd.f32 %v1116, %v1042
      %1118 = vadd.xlane.f32.xlu0 %v1117
      %v1119 = vpop.xlane.xlu0 %1118
      %v1120 = vadd.f32 %v1043, %v1044
      %v1121 = vadd.f32 %v1120, %v1045
      %v1122 = vadd.f32 %v1121, %v1046
      %1123 = vadd.xlane.f32.xlu0 %v1122
      %v1124 = vpop.xlane.xlu0 %1123
      %v1125 = vadd.f32 %v1047, %v1048
      %v1126 = vadd.f32 %v1125, %v1049
      %v1127 = vadd.f32 %v1126, %v1050
      %1128 = vadd.xlane.f32.xlu0 %v1127
      %v1129 = vpop.xlane.xlu0 %1128
      %v1130 = vadd.f32 %v1051, %v1052
      %v1131 = vadd.f32 %v1130, %v1053
      %v1132 = vadd.f32 %v1131, %v1054
      %1133 = vadd.xlane.f32.xlu0 %v1132
      %v1134 = vpop.xlane.xlu0 %1133
      %v1135 = vunpack.c.l.bf16 %v214
      %v1136 = vunpack.c.l.bf16 %v215
      %v1137 = vunpack.c.l.bf16 %v216
      %v1138 = vunpack.c.l.bf16 %v217
      %v1139 = vunpack.c.l.bf16 %v218
      %v1140 = vunpack.c.l.bf16 %v219
      %v1141 = vunpack.c.l.bf16 %v220
      %v1142 = vunpack.c.l.bf16 %v221
      %v1143 = vunpack.c.l.bf16 %v222
      %v1144 = vunpack.c.l.bf16 %v223
      %v1145 = vunpack.c.l.bf16 %v224
      %v1146 = vunpack.c.l.bf16 %v225
      %v1147 = vunpack.c.l.bf16 %v226
      %v1148 = vunpack.c.l.bf16 %v227
      %v1149 = vunpack.c.l.bf16 %v228
      %v1150 = vunpack.c.l.bf16 %v229
      %v1151 = vld [vmem:[%s138] sm:$0xf]
      %v1152 = vld [vmem:[%s138 + $0x4] sm:$0xf]
      %v1153 = vld [vmem:[%s138 + $0x8] sm:$0xf]
      %v1154 = vld [vmem:[%s138 + $0xc] sm:$0xf]
      %v1155 = vld [vmem:[%s138 + $0x10] sm:$0xf]
      %v1156 = vld [vmem:[%s138 + $0x14] sm:$0xf]
      %v1157 = vld [vmem:[%s138 + $0x18] sm:$0xf]
      %v1158 = vld [vmem:[%s138 + $0x1c] sm:$0xf]
      %v1159 = vld [vmem:[%s138 + $0x20] sm:$0xf]
      %v1160 = vld [vmem:[%s138 + $0x24] sm:$0xf]
      %v1161 = vld [vmem:[%s138 + $0x28] sm:$0xf]
      %v1162 = vld [vmem:[%s138 + $0x2c] sm:$0xf]
      %v1163 = vld [vmem:[%s138 + $0x30] sm:$0xf]
      %v1164 = vld [vmem:[%s138 + $0x34] sm:$0xf]
      %v1165 = vld [vmem:[%s138 + $0x38] sm:$0xf]
      %v1166 = vld [vmem:[%s138 + $0x3c] sm:$0xf]
      %v1167 = vunpack.c.l.bf16 %v1151
      %v1168 = vunpack.c.l.bf16 %v1152
      %v1169 = vunpack.c.l.bf16 %v1153
      %v1170 = vunpack.c.l.bf16 %v1154
      %v1171 = vunpack.c.l.bf16 %v1155
      %v1172 = vunpack.c.l.bf16 %v1156
      %v1173 = vunpack.c.l.bf16 %v1157
      %v1174 = vunpack.c.l.bf16 %v1158
      %v1175 = vunpack.c.l.bf16 %v1159
      %v1176 = vunpack.c.l.bf16 %v1160
      %v1177 = vunpack.c.l.bf16 %v1161
      %v1178 = vunpack.c.l.bf16 %v1162
      %v1179 = vunpack.c.l.bf16 %v1163
      %v1180 = vunpack.c.l.bf16 %v1164
      %v1181 = vunpack.c.l.bf16 %v1165
      %v1182 = vunpack.c.l.bf16 %v1166
      %v1183 = vmul.f32 %v1135, %v1167
      %v1184 = vmul.f32 %v1136, %v1168
      %v1185 = vmul.f32 %v1137, %v1169
      %v1186 = vmul.f32 %v1138, %v1170
      %v1187 = vmul.f32 %v1139, %v1171
      %v1188 = vmul.f32 %v1140, %v1172
      %v1189 = vmul.f32 %v1141, %v1173
      %v1190 = vmul.f32 %v1142, %v1174
      %v1191 = vmul.f32 %v1143, %v1175
      %v1192 = vmul.f32 %v1144, %v1176
      %v1193 = vmul.f32 %v1145, %v1177
      %v1194 = vmul.f32 %v1146, %v1178
      %v1195 = vmul.f32 %v1147, %v1179
      %v1196 = vmul.f32 %v1148, %v1180
      %v1197 = vmul.f32 %v1149, %v1181
      %v1198 = vmul.f32 %v1150, %v1182
      %1199 = vadd.xlane.f32.xlu0 %v1183
      %v1200 = vpop.xlane.xlu0 %1199
      %1201 = vadd.xlane.f32.xlu0 %v1184
      %v1202 = vpop.xlane.xlu0 %1201
      %1203 = vadd.xlane.f32.xlu0 %v1185
      %v1204 = vpop.xlane.xlu0 %1203
      %1205 = vadd.xlane.f32.xlu0 %v1186
      %v1206 = vpop.xlane.xlu0 %1205
      %1207 = vadd.xlane.f32.xlu0 %v1187
      %v1208 = vpop.xlane.xlu0 %1207
      %1209 = vadd.xlane.f32.xlu0 %v1188
      %v1210 = vpop.xlane.xlu0 %1209
      %1211 = vadd.xlane.f32.xlu0 %v1189
      %v1212 = vpop.xlane.xlu0 %1211
      %1213 = vadd.xlane.f32.xlu0 %v1190
      %v1214 = vpop.xlane.xlu0 %1213
      %1215 = vadd.xlane.f32.xlu0 %v1191
      %v1216 = vpop.xlane.xlu0 %1215
      %1217 = vadd.xlane.f32.xlu0 %v1192
      %v1218 = vpop.xlane.xlu0 %1217
      %1219 = vadd.xlane.f32.xlu0 %v1193
      %v1220 = vpop.xlane.xlu0 %1219
      %1221 = vadd.xlane.f32.xlu0 %v1194
      %v1222 = vpop.xlane.xlu0 %1221
      %1223 = vadd.xlane.f32.xlu0 %v1195
      %v1224 = vpop.xlane.xlu0 %1223
      %1225 = vadd.xlane.f32.xlu0 %v1196
      %v1226 = vpop.xlane.xlu0 %1225
      %1227 = vadd.xlane.f32.xlu0 %v1197
      %v1228 = vpop.xlane.xlu0 %1227
      %1229 = vadd.xlane.f32.xlu0 %v1198
      %v1230 = vpop.xlane.xlu0 %1229
      %v1231 = vmul.f32 %v1200, 10.0
      %v1232 = vmul.f32 %v1202, 10.0
      %v1233 = vmul.f32 %v1204, 10.0
      %v1234 = vmul.f32 %v1206, 10.0
      %v1235 = vmul.f32 %v1208, 10.0
      %v1236 = vmul.f32 %v1210, 10.0
      %v1237 = vmul.f32 %v1212, 10.0
      %v1238 = vmul.f32 %v1214, 10.0
      %v1239 = vmul.f32 %v1216, 10.0
      %v1240 = vmul.f32 %v1218, 10.0
      %v1241 = vmul.f32 %v1220, 10.0
      %v1242 = vmul.f32 %v1222, 10.0
      %v1243 = vmul.f32 %v1224, 10.0
      %v1244 = vmul.f32 %v1226, 10.0
      %v1245 = vmul.f32 %v1228, 10.0
      %v1246 = vmul.f32 %v1230, 10.0
      %v1247 = vlog2.pop %v1059
      %v1248 = vmul.f32 %v1247, 0.6931472
      %v1249 = vlog2.pop %v1064
      %v1250 = vmul.f32 %v1249, 0.6931472
      %v1251 = vlog2.pop %v1069
      %v1252 = vmul.f32 %v1251, 0.6931472
      %v1253 = vlog2.pop %v1074
      %v1254 = vmul.f32 %v1253, 0.6931472
      %v1255 = vlog2.pop %v1079
      %v1256 = vmul.f32 %v1255, 0.6931472
      %v1257 = vlog2.pop %v1084
      %v1258 = vmul.f32 %v1257, 0.6931472
      %v1259 = vlog2.pop %v1089
      %v1260 = vmul.f32 %v1259, 0.6931472
      %v1261 = vlog2.pop %v1094
      %v1262 = vmul.f32 %v1261, 0.6931472
      %v1263 = vlog2.pop %v1099
      %v1264 = vmul.f32 %v1263, 0.6931472
      %v1265 = vlog2.pop %v1104
      %v1266 = vmul.f32 %v1265, 0.6931472
      %v1267 = vlog2.pop %v1109
      %v1268 = vmul.f32 %v1267, 0.6931472
      %v1269 = vlog2.pop %v1114
      %v1270 = vmul.f32 %v1269, 0.6931472
      %v1271 = vlog2.pop %v1119
      %v1272 = vmul.f32 %v1271, 0.6931472
      %v1273 = vlog2.pop %v1124
      %v1274 = vmul.f32 %v1273, 0.6931472
      %v1275 = vlog2.pop %v1129
      %v1276 = vmul.f32 %v1275, 0.6931472
      %v1277 = vlog2.pop %v1134
      %v1278 = vmul.f32 %v1277, 0.6931472
      %v1279 = vsub.f32 %v1248, %v1231
      %v1280 = vsub.f32 %v1250, %v1232
      %v1281 = vsub.f32 %v1252, %v1233
      %v1282 = vsub.f32 %v1254, %v1234
      %v1283 = vsub.f32 %v1256, %v1235
      %v1284 = vsub.f32 %v1258, %v1236
      %v1285 = vsub.f32 %v1260, %v1237
      %v1286 = vsub.f32 %v1262, %v1238
      %v1287 = vsub.f32 %v1264, %v1239
      %v1288 = vsub.f32 %v1266, %v1240
      %v1289 = vsub.f32 %v1268, %v1241
      %v1290 = vsub.f32 %v1270, %v1242
      %v1291 = vsub.f32 %v1272, %v1243
      %v1292 = vsub.f32 %v1274, %v1244
      %v1293 = vsub.f32 %v1276, %v1245
      %v1294 = vsub.f32 %v1278, %v1246
      %vm1295 = vcmask 7168
      %v1296 = vsel %vm1295, %v1279, 0.0
      %v1297 = vsel %vm1295, %v1280, 0.0
      %v1298 = vadd.f32 %v1296, %v1297
      %v1299 = vsel %vm1295, %v1281, 0.0
      %v1300 = vadd.f32 %v1298, %v1299
      %v1301 = vsel %vm1295, %v1282, 0.0
      %v1302 = vadd.f32 %v1300, %v1301
      %v1303 = vsel %vm1295, %v1283, 0.0
      %v1304 = vadd.f32 %v1302, %v1303
      %v1305 = vsel %vm1295, %v1284, 0.0
      %v1306 = vadd.f32 %v1304, %v1305
      %v1307 = vsel %vm1295, %v1285, 0.0
      %v1308 = vadd.f32 %v1306, %v1307
      %v1309 = vsel %vm1295, %v1286, 0.0
      %v1310 = vadd.f32 %v1308, %v1309
      %v1311 = vsel %vm1295, %v1287, 0.0
      %v1312 = vadd.f32 %v1310, %v1311
      %v1313 = vsel %vm1295, %v1288, 0.0
      %v1314 = vadd.f32 %v1312, %v1313
      %v1315 = vsel %vm1295, %v1289, 0.0
      %v1316 = vadd.f32 %v1314, %v1315
      %v1317 = vsel %vm1295, %v1290, 0.0
      %v1318 = vadd.f32 %v1316, %v1317
      %v1319 = vsel %vm1295, %v1291, 0.0
      %v1320 = vadd.f32 %v1318, %v1319
      %v1321 = vsel %vm1295, %v1292, 0.0
      %v1322 = vadd.f32 %v1320, %v1321
      %v1323 = vsel %vm1295, %v1293, 0.0
      %v1324 = vadd.f32 %v1322, %v1323
      %v1325 = vsel %vm1295, %v1294, 0.0
      %v1326 = vadd.f32 %v1324, %v1325
      %1327 = vadd.xlane.f32.xlu0 %v1326
      %v1328 = vpop.xlane.xlu0 %1327
      %v1329 = vrot.slane %v1328, 4
      %v1330 = vadd.f32 %v1328, %v1329
      %v1331 = vrot.slane %v1330, 2
      %v1332 = vadd.f32 %v1330, %v1331
      %v1333 = vrot.slane %v1332, 1
      %v1334 = vadd.f32 %v1332, %v1333
      %s1335 = vtos %v1334
      %v1336 = vstv %s1335
      %1337 = vst [vmem:[%s143] sm:$0xff] %v1336
      %p1338 = scmp.lt.s32.totalorder %s13, 3
      %s1339 = scalar_select %p1338, %s13, 3
      %s1340 = smul.addr %s1339, 8
      %s1341 = scalar_lea.vmem %s2, %s1340
      // Predicated region
      $region29: #{_lambda_.1} parent=27 // pred_check
        %p1342 = pneg %p78
      $region30: #{_lambda_.1} parent=27 // pred_check_branch
        %1344 = sbr.rel (%p1342) target = $region32
      $region31: #{_lambda_.1} parent=27 // pred_region
        _
      $region32: #{_lambda_.1} parent=27 // pred_fallthru
        _
    $region28: #{_lambda_.1} parent=5 // pred_fallthru
      _
    %p1345 = scmp.le.s32.totalorder 2, %s8
    // Predicated region
    $region33: #{_lambda_.1} parent=5 // pred_check
      %p1346 = pneg %p1345
    $region34: #{_lambda_.1} parent=5 // pred_check_branch
      %1348 = sbr.rel (%p1346) target = $region36
    $region35: #{_lambda_.1} parent=5 // pred_region
      %s1349 = ssub.s32 %s8, 2
      // Predicated region
      $region37: #{_lambda_.1} parent=35 // pred_check
        %p1350 = pneg %p84
      $region38: #{_lambda_.1} parent=35 // pred_check_branch
        %1352 = sbr.rel (%p1350) target = $region40
      $region39: #{_lambda_.1} parent=35 // pred_region
        %p1353 = scmp.lt.s32.totalorder %s14, 3
        %s1354 = scalar_select %p1353, %s14, 3
        %s1355 = smul.addr %s1354, 8
        %s1356 = scalar_lea.vmem %s2, %s1355
      $region40: #{_lambda_.1} parent=35 // pred_fallthru
        _
    $region36: #{_lambda_.1} parent=5 // pred_fallthru
      _
  $region6: #{_lambda_.1} parent=0 // loop_footer
    %s12 = sadd.s32 1, %s8
  $region7: #{_lambda_.1} parent=0 // loop_footer_branch
    %7 = sbr.rel target = $region3
  $region8: #{_lambda_.1} parent=0 // loop_exit
    _

</llo_original>
